<compile_context>
chip_gen: v6e
topology: v6e:2x2x1
jax: 0.10.0
libtpu: 0.0.40
codegen_flags: <defaults>
</compile_context>

<pallas_src>
import functools

import jax
import jax.numpy as jnp
from jax.experimental import pallas as pl
from jax.experimental.pallas import tpu as pltpu


def _round_up(x: int, m: int) -> int:
    return (x + m - 1) // m * m


def _pad2(a, rows, cols):
    r, c = a.shape
    return jnp.pad(a, ((0, rows - r), (0, cols - c)))


def _pad1(a, n):
    return jnp.pad(a, (0, n - a.shape[0]))


# ----------------------------------------------------------------------------
# Kernel
# ----------------------------------------------------------------------------
def _plasticity_kernel(x_ref, h_ref,
                       wx_ref, bx_ref,      # fused x-side weights [Hp, 4Hp+Hhp] bf16, bias f32
                       wh_ref, bh_ref,      # fused h-side weights [Hp, 4Hp]     bf16, bias f32
                       ws2_ref, bs2_ref,    # signal-encoder layer-2            bf16, bias f32
                       nm_ref, ar_ref, comb_ref,
                       *, Hp: int):
    """new_memory, adaptive_rate and the fused (1-rate)*h + rate*new_mem combine."""
    x = x_ref[...]                                   # [Bp, Hp] f32
    h = h_ref[...]                                   # [Bp, Hp] f32
    xb = x.astype(jnp.bfloat16)
    hb = h.astype(jnp.bfloat16)

    # Two wide MXU passes (f32 accumulation).
    gx = jnp.dot(xb, wx_ref[...], preferred_element_type=jnp.float32) + bx_ref[...]  # [Bp, 4Hp+Hhp]
    gh = jnp.dot(hb, wh_ref[...], preferred_element_type=jnp.float32) + bh_ref[...]  # [Bp, 4Hp]

    # GRU gates (PyTorch order r, z, n). All slices are multiples of 128 -> lane-aligned.
    r = jax.nn.sigmoid(gx[:, 0:Hp] + gh[:, 0:Hp])
    z = jax.nn.sigmoid(gx[:, Hp:2 * Hp] + gh[:, Hp:2 * Hp])
    n = jnp.tanh(gx[:, 2 * Hp:3 * Hp] + r * gh[:, 2 * Hp:3 * Hp])   # gh n-block already has bhh_n
    new_mem = (1.0 - z) * n + z * h                                  # [Bp, Hp]

    # Plasticity gate: sigmoid(x @ Wpg_x + h @ Wpg_h + bpg)  (bpg folded into gx block).
    pg = jax.nn.sigmoid(gx[:, 3 * Hp:4 * Hp] + gh[:, 3 * Hp:4 * Hp])

    # Signal strength: relu(x @ W1 + b1) -> sigmoid(. @ W2 + b2). First layer is the gx tail block.
    s1 = jnp.maximum(gx[:, 4 * Hp:], 0.0)                            # [Bp, Hhp]
    ss = jax.nn.sigmoid(
        jnp.dot(s1.astype(jnp.bfloat16), ws2_ref[...],
                preferred_element_type=jnp.float32) + bs2_ref[...])  # [Bp, Hp]

    ar = pg * ss

    nm_ref[...] = new_mem
    ar_ref[...] = ar
    comb_ref[...] = (1.0 - ar) * h + ar * new_mem   # exact result for the [B, H] semantics


# ----------------------------------------------------------------------------
# Parameter construction / packing
# ----------------------------------------------------------------------------
def init_params(key, hidden_dim):
    """Raw PyTorch-shaped parameters (GRU biases = 0.1, like the module's __init__)."""
    H = hidden_dim
    ks = jax.random.split(key, 8)
    s = 1.0 / float(H) ** 0.5

    def u(k, shape):
        return jax.random.uniform(k, shape, jnp.float32, -s, s)

    return dict(
        wih=u(ks[0], (3 * H, H)),                       # GRU weight_ih_l0
        whh=u(ks[1], (3 * H, H)),                       # GRU weight_hh_l0
        bih=jnp.full((3 * H,), 0.1, jnp.float32),
        bhh=jnp.full((3 * H,), 0.1, jnp.float32),
        wpg=u(ks[2], (H, 2 * H)), bpg=u(ks[3], (H,)),    # plasticity_gate Linear(2H, H)
        ws1=u(ks[4], (H // 2, H)), bs1=u(ks[5], (H // 2,)),
        ws2=u(ks[6], (H, H // 2)), bs2=u(ks[7], (H,)),
    )


def pack_params(raw, hidden_dim):
    """Fuse + pad + bf16-cast weights into the kernel layout (done once, outside the hot path)."""
    H = hidden_dim
    assert H % 2 == 0, "hidden_dim must be even (signal encoder uses H // 2)"
    Hh = H // 2
    Hp = _round_up(H, 128)
    Hhp = _round_up(Hh, 128)

    wih, whh = raw["wih"], raw["whh"]
    bih, bhh = raw["bih"], raw["bhh"]
    wpg, bpg = raw["wpg"], raw["bpg"]
    ws1, bs1 = raw["ws1"], raw["bs1"]
    ws2, bs2 = raw["ws2"], raw["bs2"]

    def gate_t(w, i):                                   # i-th [H,H] gate block, transposed to [in,out]
        return w[i * H:(i + 1) * H, :].T

    # x-side fused weight:  [r | z | n | pg_x | s1]  -> [Hp, 4*Hp + Hhp]
    wx = jnp.concatenate([
        _pad2(gate_t(wih, 0), Hp, Hp),
        _pad2(gate_t(wih, 1), Hp, Hp),
        _pad2(gate_t(wih, 2), Hp, Hp),
        _pad2(wpg[:, :H].T, Hp, Hp),
        _pad2(ws1.T, Hp, Hhp),
    ], axis=1).astype(jnp.bfloat16)

    # x-side fused bias (r/z GRU biases pre-folded: bih + bhh).
    bx = jnp.concatenate([
        _pad1(bih[0:H] + bhh[0:H], Hp),
        _pad1(bih[H:2 * H] + bhh[H:2 * H], Hp),
        _pad1(bih[2 * H:3 * H], Hp),
        _pad1(bpg, Hp),
        _pad1(bs1, Hhp),
    ]).reshape(1, -1).astype(jnp.float32)

    # h-side fused weight:  [r | z | n | pg_h]  -> [Hp, 4*Hp]
    wh = jnp.concatenate([
        _pad2(gate_t(whh, 0), Hp, Hp),
        _pad2(gate_t(whh, 1), Hp, Hp),
        _pad2(gate_t(whh, 2), Hp, Hp),
        _pad2(wpg[:, H:].T, Hp, Hp),
    ], axis=1).astype(jnp.bfloat16)

    # h-side bias: only bhh_n (needed inside the r * (...) term); everything else folded into bx.
    bh = jnp.concatenate([
        jnp.zeros((Hp,), jnp.float32),
        jnp.zeros((Hp,), jnp.float32),
        _pad1(bhh[2 * H:3 * H], Hp),
        jnp.zeros((Hp,), jnp.float32),
    ]).reshape(1, -1)

    ws2_p = _pad2(ws2.T, Hhp, Hp).astype(jnp.bfloat16)  # [Hhp, Hp]
    bs2_p = _pad1(bs2, Hp).reshape(1, -1).astype(jnp.float32)

    return dict(wx=wx, bx=bx, wh=wh, bh=bh, ws2=ws2_p, bs2=bs2_p)


# ----------------------------------------------------------------------------
# Forward wrapper (matches NeuralPlasticityMemory.forward semantics)
# ----------------------------------------------------------------------------
def neural_plasticity_memory(inputs, hidden_state, packed):
    B, S, H = inputs.shape
    assert S == 1, "forward() uses inputs.squeeze(1): seq_len must be 1"
    assert H % 2 == 0, "hidden_dim must be even"

    Hp = packed["wh"].shape[0]
    Nx = packed["wx"].shape[1]
    Nh = packed["wh"].shape[1]
    Hhp = packed["ws2"].shape[0]
    Bp = _round_up(B, 8)

    # Pad to [Bp, Hp] so every vreg/store is dense (lane = 128, sublane = 8).
    x2d = inputs[:, 0, :]
    xp = jnp.pad(x2d, ((0, Bp - B), (0, Hp - H)))
    hp = jnp.pad(hidden_state, ((0, Bp - B), (0, Hp - H)))

    # Static cost / VMEM accounting (Python ints).
    flops = 2 * Bp * Hp * (Nx + Nh) + 2 * Bp * Hhp * Hp + 10 * Bp * Hp
    transcendentals = 5 * Bp * Hp
    io_bytes = (2 * Bp * Hp * 4                      # x, h (f32)
                + Hp * Nx * 2 + Nx * 4               # wx (bf16) + bx (f32)
                + Hp * Nh * 2 + Nh * 4               # wh (bf16) + bh (f32)
                + Hhp * Hp * 2 + Hp * 4              # ws2 (bf16) + bs2 (f32)
                + 3 * Bp * Hp * 4)                   # outputs (f32)
    scratch_bytes = Bp * (Nx + Nh) * 4               # gx / gh intermediates
    vmem_limit = int(min(100 * 2 ** 20, max(32 * 2 ** 20, 4 * (io_bytes + scratch_bytes))))

    vmem = pl.BlockSpec(memory_space=pltpu.MemorySpace.VMEM)
    new_memory, adaptive_rate, combined = pl.pallas_call(
        functools.partial(_plasticity_kernel, Hp=Hp),
        out_shape=(jax.ShapeDtypeStruct((Bp, Hp), jnp.float32),
                   jax.ShapeDtypeStruct((Bp, Hp), jnp.float32),
                   jax.ShapeDtypeStruct((Bp, Hp), jnp.float32)),
        in_specs=[vmem] * 8,
        out_specs=(vmem, vmem, vmem),
        input_output_aliases={1: 2},   # reuse padded hidden-state HBM buffer for the combined output
        compiler_params=pltpu.CompilerParams(vmem_limit_bytes=vmem_limit),
        cost_estimate=pl.CostEstimate(flops=flops,
                                      transcendentals=transcendentals,
                                      bytes_accessed=io_bytes),
    )(xp, hp,
      packed["wx"], packed["bx"], packed["wh"], packed["bh"],
      packed["ws2"], packed["bs2"])

    if B == 1:
        # GRU output .squeeze(0) drops the batch dim -> plain [1, H] result; combine already fused.
        return combined[:1, :H]

    # B > 1: reproduce PyTorch's `.squeeze(0)` broadcasting artifact exactly:
    # new_memory stays [B, 1, H], so the final expression broadcasts to [B, B, H].
    nm = new_memory[:B, :H][:, None, :]              # [B, 1, H]
    ar = adaptive_rate[:B, :H]                       # [B, H]
    return (1.0 - ar) * hidden_state + ar * nm       # [B, B, H]


if __name__ == "__main__":
    B, S, H = 2, 1, 32
    key = jax.random.PRNGKey(0)
    k_in, k_h, k_p = jax.random.split(key, 3)

    inputs = jax.random.normal(k_in, (B, S, H), jnp.float32)
    hidden_state = jax.random.normal(k_h, (B, H), jnp.float32)
    packed = pack_params(init_params(k_p, H), H)

    fwd = jax.jit(neural_plasticity_memory)
    out = fwd(inputs, hidden_state, packed)
    jax.block_until_ready(out)
    print("KERNEL_OK")
</pallas_src>

<mosaic_0001>
module attributes {stable_mosaic.version = 11 : i64} {
  func.func @_plasticity_kernel(%arg0: memref<8x128xf32, #tpu.memory_space<vmem>>, %arg1: memref<8x128xf32, #tpu.memory_space<vmem>>, %arg2: memref<128x640xbf16, #tpu.memory_space<vmem>>, %arg3: memref<1x640xf32, #tpu.memory_space<vmem>>, %arg4: memref<128x512xbf16, #tpu.memory_space<vmem>>, %arg5: memref<1x512xf32, #tpu.memory_space<vmem>>, %arg6: memref<128x128xbf16, #tpu.memory_space<vmem>>, %arg7: memref<1x128xf32, #tpu.memory_space<vmem>>, %arg8: memref<8x128xf32, #tpu.memory_space<vmem>>, %arg9: memref<8x128xf32, #tpu.memory_space<vmem>>, %arg10: memref<8x128xf32, #tpu.memory_space<vmem>>) attributes {dimension_semantics = [], scalar_prefetch = 0 : i64, scratch_operands = 0 : i64, tpu.core_type = #tpu.core_type<tc>} {
    %c0 = arith.constant 0 : index
    %c0_0 = arith.constant 0 : index
    %0 = vector.load %arg0[%c0, %c0_0] : memref<8x128xf32, #tpu.memory_space<vmem>>, vector<8x128xf32>
    %c0_1 = arith.constant 0 : index
    %c0_2 = arith.constant 0 : index
    %1 = vector.load %arg1[%c0_1, %c0_2] : memref<8x128xf32, #tpu.memory_space<vmem>>, vector<8x128xf32>
    %2 = arith.truncf %0 : vector<8x128xf32> to vector<8x128xbf16>
    %3 = arith.truncf %1 : vector<8x128xf32> to vector<8x128xbf16>
    %c0_3 = arith.constant 0 : index
    %c0_4 = arith.constant 0 : index
    %4 = vector.load %arg2[%c0_3, %c0_4] : memref<128x640xbf16, #tpu.memory_space<vmem>>, vector<128x640xbf16>
    %cst = arith.constant dense<0.000000e+00> : vector<8x640xf32>
    %5 = tpu.matmul %2, %4, %cst {dimension_numbers = #tpu.dot_dimension_numbers<[1], [0], [0], [1], [0, 0, 1, 1], [], []>} : vector<8x128xbf16>, vector<128x640xbf16>, vector<8x640xf32> -> vector<8x640xf32>
    %c0_5 = arith.constant 0 : index
    %c0_6 = arith.constant 0 : index
    %6 = vector.load %arg3[%c0_5, %c0_6] : memref<1x640xf32, #tpu.memory_space<vmem>>, vector<1x640xf32>
    %7 = vector.broadcast %6 : vector<1x640xf32> to vector<8x640xf32>
    %8 = arith.addf %5, %7 : vector<8x640xf32>
    %c0_7 = arith.constant 0 : index
    %c0_8 = arith.constant 0 : index
    %9 = vector.load %arg4[%c0_7, %c0_8] : memref<128x512xbf16, #tpu.memory_space<vmem>>, vector<128x512xbf16>
    %cst_9 = arith.constant dense<0.000000e+00> : vector<8x512xf32>
    %10 = tpu.matmul %3, %9, %cst_9 {dimension_numbers = #tpu.dot_dimension_numbers<[1], [0], [0], [1], [0, 0, 1, 1], [], []>} : vector<8x128xbf16>, vector<128x512xbf16>, vector<8x512xf32> -> vector<8x512xf32>
    %c0_10 = arith.constant 0 : index
    %c0_11 = arith.constant 0 : index
    %11 = vector.load %arg5[%c0_10, %c0_11] : memref<1x512xf32, #tpu.memory_space<vmem>>, vector<1x512xf32>
    %12 = vector.broadcast %11 : vector<1x512xf32> to vector<8x512xf32>
    %13 = arith.addf %10, %12 : vector<8x512xf32>
    %14 = vector.extract_strided_slice %8 {offsets = [0, 0], sizes = [8, 128], strides = [1, 1]} : vector<8x640xf32> to vector<8x128xf32>
    %15 = vector.extract_strided_slice %13 {offsets = [0, 0], sizes = [8, 128], strides = [1, 1]} : vector<8x512xf32> to vector<8x128xf32>
    %16 = arith.addf %14, %15 : vector<8x128xf32>
    %17 = arith.negf %16 : vector<8x128xf32>
    %18 = math.exp %17 : vector<8x128xf32>
    %cst_12 = arith.constant 1.000000e+00 : f32
    %19 = vector.broadcast %cst_12 : f32 to vector<8x128xf32>
    %20 = arith.addf %19, %18 : vector<8x128xf32>
    %21 = arith.divf %19, %20 : vector<8x128xf32>
    %22 = vector.extract_strided_slice %8 {offsets = [0, 128], sizes = [8, 128], strides = [1, 1]} : vector<8x640xf32> to vector<8x128xf32>
    %23 = vector.extract_strided_slice %13 {offsets = [0, 128], sizes = [8, 128], strides = [1, 1]} : vector<8x512xf32> to vector<8x128xf32>
    %24 = arith.addf %22, %23 : vector<8x128xf32>
    %25 = arith.negf %24 : vector<8x128xf32>
    %26 = math.exp %25 : vector<8x128xf32>
    %cst_13 = arith.constant 1.000000e+00 : f32
    %27 = vector.broadcast %cst_13 : f32 to vector<8x128xf32>
    %28 = arith.addf %27, %26 : vector<8x128xf32>
    %29 = arith.divf %27, %28 : vector<8x128xf32>
    %30 = vector.extract_strided_slice %8 {offsets = [0, 256], sizes = [8, 128], strides = [1, 1]} : vector<8x640xf32> to vector<8x128xf32>
    %31 = vector.extract_strided_slice %13 {offsets = [0, 256], sizes = [8, 128], strides = [1, 1]} : vector<8x512xf32> to vector<8x128xf32>
    %32 = arith.mulf %21, %31 : vector<8x128xf32>
    %33 = arith.addf %30, %32 : vector<8x128xf32>
    %34 = math.tanh %33 : vector<8x128xf32>
    %cst_14 = arith.constant 1.000000e+00 : f32
    %35 = vector.broadcast %cst_14 : f32 to vector<8x128xf32>
    %36 = arith.subf %35, %29 : vector<8x128xf32>
    %37 = arith.mulf %36, %34 : vector<8x128xf32>
    %38 = arith.mulf %29, %1 : vector<8x128xf32>
    %39 = arith.addf %37, %38 : vector<8x128xf32>
    %40 = vector.extract_strided_slice %8 {offsets = [0, 384], sizes = [8, 128], strides = [1, 1]} : vector<8x640xf32> to vector<8x128xf32>
    %41 = vector.extract_strided_slice %13 {offsets = [0, 384], sizes = [8, 128], strides = [1, 1]} : vector<8x512xf32> to vector<8x128xf32>
    %42 = arith.addf %40, %41 : vector<8x128xf32>
    %43 = arith.negf %42 : vector<8x128xf32>
    %44 = math.exp %43 : vector<8x128xf32>
    %cst_15 = arith.constant 1.000000e+00 : f32
    %45 = vector.broadcast %cst_15 : f32 to vector<8x128xf32>
    %46 = arith.addf %45, %44 : vector<8x128xf32>
    %47 = arith.divf %45, %46 : vector<8x128xf32>
    %48 = vector.extract_strided_slice %8 {offsets = [0, 512], sizes = [8, 128], strides = [1, 1]} : vector<8x640xf32> to vector<8x128xf32>
    %cst_16 = arith.constant 0.000000e+00 : f32
    %49 = vector.broadcast %cst_16 : f32 to vector<8x128xf32>
    %50 = arith.maximumf %48, %49 : vector<8x128xf32>
    %51 = arith.truncf %50 : vector<8x128xf32> to vector<8x128xbf16>
    %c0_17 = arith.constant 0 : index
    %c0_18 = arith.constant 0 : index
    %52 = vector.load %arg6[%c0_17, %c0_18] : memref<128x128xbf16, #tpu.memory_space<vmem>>, vector<128x128xbf16>
    %cst_19 = arith.constant dense<0.000000e+00> : vector<8x128xf32>
    %53 = tpu.matmul %51, %52, %cst_19 {dimension_numbers = #tpu.dot_dimension_numbers<[1], [0], [0], [1], [0, 0, 1, 1], [], []>} : vector<8x128xbf16>, vector<128x128xbf16>, vector<8x128xf32> -> vector<8x128xf32>
    %c0_20 = arith.constant 0 : index
    %c0_21 = arith.constant 0 : index
    %54 = vector.load %arg7[%c0_20, %c0_21] : memref<1x128xf32, #tpu.memory_space<vmem>>, vector<1x128xf32>
    %55 = vector.broadcast %54 : vector<1x128xf32> to vector<8x128xf32>
    %56 = arith.addf %53, %55 : vector<8x128xf32>
    %57 = arith.negf %56 : vector<8x128xf32>
    %58 = math.exp %57 : vector<8x128xf32>
    %cst_22 = arith.constant 1.000000e+00 : f32
    %59 = vector.broadcast %cst_22 : f32 to vector<8x128xf32>
    %60 = arith.addf %59, %58 : vector<8x128xf32>
    %61 = arith.divf %59, %60 : vector<8x128xf32>
    %62 = arith.mulf %47, %61 : vector<8x128xf32>
    %c0_23 = arith.constant 0 : index
    %c0_24 = arith.constant 0 : index
    %63 = vector.load %arg8[%c0_23, %c0_24] : memref<8x128xf32, #tpu.memory_space<vmem>>, vector<8x128xf32>
    tpu.vector_store %arg8[%c0_23, %c0_24], %39 {strides = array<i32>} : memref<8x128xf32, #tpu.memory_space<vmem>>, vector<8x128xf32>,
    %c0_25 = arith.constant 0 : index
    %c0_26 = arith.constant 0 : index
    %64 = vector.load %arg9[%c0_25, %c0_26] : memref<8x128xf32, #tpu.memory_space<vmem>>, vector<8x128xf32>
    tpu.vector_store %arg9[%c0_25, %c0_26], %62 {strides = array<i32>} : memref<8x128xf32, #tpu.memory_space<vmem>>, vector<8x128xf32>,
    %cst_27 = arith.constant 1.000000e+00 : f32
    %65 = vector.broadcast %cst_27 : f32 to vector<8x128xf32>
    %66 = arith.subf %65, %62 : vector<8x128xf32>
    %67 = arith.mulf %66, %1 : vector<8x128xf32>
    %68 = arith.mulf %62, %39 : vector<8x128xf32>
    %69 = arith.addf %67, %68 : vector<8x128xf32>
    %c0_28 = arith.constant 0 : index
    %c0_29 = arith.constant 0 : index
    %70 = vector.load %arg10[%c0_28, %c0_29] : memref<8x128xf32, #tpu.memory_space<vmem>>, vector<8x128xf32>
    tpu.vector_store %arg10[%c0_28, %c0_29], %69 {strides = array<i32>} : memref<8x128xf32, #tpu.memory_space<vmem>>, vector<8x128xf32>,
    return
  }
}

</mosaic_0001>

<llo_original>
// kernel: neural_plasticity_memory.1
$region0: #{neural_plasticity_memory.1}
  #allocation0 [shape = 'u32[]', space=smem, size = 0x4, offset = 0x4, fixed_abs, tag = 'smem constant byte address 0x4 - core index']
  #allocation1 [shape = 'u32[144,128]{1,0:T(1,128)}', space=vmem, size = 0x12000, scoped, tag = 'internal scratch']
  %s0 = inlined_call_operand.vmem [shape: f32[8,128], index: 0, kind: input, shape index: {}]
  %s1 = inlined_call_operand.vmem [shape: f32[8,128], index: 1, kind: input, shape index: {}, may-alias: {1,10}]
  %s2 = inlined_call_operand.hbm [shape: bf16[128,640], index: 2, kind: input, shape index: {}]
  %s3 = inlined_call_operand.vmem [shape: f32[1,640], index: 3, kind: input, shape index: {}]
  %s4 = inlined_call_operand.hbm [shape: bf16[128,512], index: 4, kind: input, shape index: {}]
  %s5 = inlined_call_operand.vmem [shape: f32[1,512], index: 5, kind: input, shape index: {}]
  %s6 = inlined_call_operand.hbm [shape: bf16[128,128], index: 6, kind: input, shape index: {}]
  %s7 = inlined_call_operand.vmem [shape: f32[1,128], index: 7, kind: input, shape index: {}]
  %s8 = inlined_call_operand.vmem [shape: f32[8,128], index: 8, kind: output, shape index: {0}]
  %s9 = inlined_call_operand.vmem [shape: f32[8,128], index: 9, kind: output, shape index: {1}]
  %s10 = inlined_call_operand.vmem [shape: f32[8,128], index: 10, kind: output, shape index: {2}, may-alias: {1,10}]
  %11 = xla_tuple %s8, %s9, %s10
  %s12 = sld [smem:[#allocation0]]
  $region70: #{neural_plasticity_memory.1} parent=0
    _
  %s14 = ssub.s32 1, %s12
  %s15 = scalar_select 0, %s14, %s12
  $region1: #{neural_plasticity_memory.1} parent=0
    #allocation2 [shape = 'u8[163840]{0}', space=vmem, size = 0x28000, scoped, tag = 'input window, operand 2, single buffered']
    #allocation3 [shape = 's32[1]{0}', space=sflag, size = 0x4, scoped, tag = 'scoped memory for neural_plasticity_memory.1']
    #allocation4 [shape = 'u8[131072]{0}', space=vmem, size = 0x20000, scoped, tag = 'input window, operand 4, single buffered']
    #allocation5 [shape = 's32[1]{0}', space=sflag, size = 0x4, scoped, tag = 'scoped memory for neural_plasticity_memory.1']
    #allocation6 [shape = 'u8[32768]{0}', space=vmem, size = 0x8000, scoped, tag = 'input window, operand 6, single buffered']
    %16 = vsyncpa [#allocation3], 0
    %17 = vsyncpa [#allocation5], 0
    // Predicated region
    $region2: #{neural_plasticity_memory.1} parent=1 // pred_check
      _
    $region3: #{neural_plasticity_memory.1} parent=1 // pred_check_branch
      %19 = sbr.rel (0) target = $region5
    $region4: #{neural_plasticity_memory.1} parent=1 // pred_region
      _
    $region5: #{neural_plasticity_memory.1} parent=1 // pred_fallthru
      _
    // Predicated region
    $region6: #{neural_plasticity_memory.1} parent=1 // pred_check
      _
    $region7: #{neural_plasticity_memory.1} parent=1 // pred_check_branch
      %21 = sbr.rel (0) target = $region9
    $region8: #{neural_plasticity_memory.1} parent=1 // pred_region
      _
    $region9: #{neural_plasticity_memory.1} parent=1 // pred_fallthru
      _
    // Predicated region
    $region10: #{neural_plasticity_memory.1} parent=1 // pred_check
      _
    $region11: #{neural_plasticity_memory.1} parent=1 // pred_check_branch
      %23 = sbr.rel (0) target = $region13
    $region12: #{neural_plasticity_memory.1} parent=1 // pred_region
      %s25 = ssub.s32 5120, 5120
      %26 = vsyncadd [#allocation3], %s25
      %s27 = sshll.u32 [#allocation2], 4
      %s28 = int_to_ptr.vmem [resolvable:$true] %s27
      %33 = dma.hbm_to_vmem [thread:$0]  %s2, 5120, %s28, [#allocation3], 320, 320, 20
    $region13: #{neural_plasticity_memory.1} parent=1 // pred_fallthru
      _
    // Predicated region
    $region14: #{neural_plasticity_memory.1} parent=1 // pred_check
      _
    $region15: #{neural_plasticity_memory.1} parent=1 // pred_check_branch
      %35 = sbr.rel (0) target = $region17
    $region16: #{neural_plasticity_memory.1} parent=1 // pred_region
      _
    $region17: #{neural_plasticity_memory.1} parent=1 // pred_fallthru
      _
    // Predicated region
    $region18: #{neural_plasticity_memory.1} parent=1 // pred_check
      _
    $region19: #{neural_plasticity_memory.1} parent=1 // pred_check_branch
      %37 = sbr.rel (0) target = $region21
    $region20: #{neural_plasticity_memory.1} parent=1 // pred_region
      %s39 = ssub.s32 4096, 4096
      %40 = vsyncadd [#allocation5], %s39
      %s41 = sshll.u32 [#allocation4], 4
      %s42 = int_to_ptr.vmem [resolvable:$true] %s41
      %47 = dma.hbm_to_vmem [thread:$0]  %s4, 4096, %s42, [#allocation5], 256, 256, 16
    $region21: #{neural_plasticity_memory.1} parent=1 // pred_fallthru
      _
    // Predicated region
    $region22: #{neural_plasticity_memory.1} parent=1 // pred_check
      _
    $region23: #{neural_plasticity_memory.1} parent=1 // pred_check_branch
      %49 = sbr.rel (0) target = $region25
    $region24: #{neural_plasticity_memory.1} parent=1 // pred_region
      _
    $region25: #{neural_plasticity_memory.1} parent=1 // pred_fallthru
      _
    // Predicated region
    $region26: #{neural_plasticity_memory.1} parent=1 // pred_check
      _
    $region27: #{neural_plasticity_memory.1} parent=1 // pred_check_branch
      %51 = sbr.rel (0) target = $region29
    $region28: #{neural_plasticity_memory.1} parent=1 // pred_region
      %s53 = ssub.s32 1024, 1024
      %54 = vsyncadd [#allocation5], %s53
      %s55 = sshll.u32 [#allocation6], 4
      %s56 = int_to_ptr.vmem [resolvable:$true] %s55
      %61 = dma.hbm_to_vmem [thread:$0]  %s6, 1024, %s56, [#allocation5], 64, 64, 4
    $region29: #{neural_plasticity_memory.1} parent=1 // pred_fallthru
      _
    // Predicated region
    $region30: #{neural_plasticity_memory.1} parent=1 // pred_check
      _
    $region31: #{neural_plasticity_memory.1} parent=1 // pred_check_branch
      %63 = sbr.rel (0) target = $region33
    $region32: #{neural_plasticity_memory.1} parent=1 // pred_region
      _
    $region33: #{neural_plasticity_memory.1} parent=1 // pred_fallthru
      _
    // Predicated region
    $region34: #{neural_plasticity_memory.1} parent=1 // pred_check
      _
    $region35: #{neural_plasticity_memory.1} parent=1 // pred_check_branch
      %65 = sbr.rel (0) target = $region37
    $region36: #{neural_plasticity_memory.1} parent=1 // pred_region
      %66 = dma.done [#allocation3], 5120
    $region37: #{neural_plasticity_memory.1} parent=1 // pred_fallthru
      _
    // Predicated region
    $region38: #{neural_plasticity_memory.1} parent=1 // pred_check
      _
    $region39: #{neural_plasticity_memory.1} parent=1 // pred_check_branch
      %68 = sbr.rel (0) target = $region41
    $region40: #{neural_plasticity_memory.1} parent=1 // pred_region
      %69 = dma.done [#allocation5], 4096
    $region41: #{neural_plasticity_memory.1} parent=1 // pred_fallthru
      _
    // Predicated region
    $region42: #{neural_plasticity_memory.1} parent=1 // pred_check
      _
    $region43: #{neural_plasticity_memory.1} parent=1 // pred_check_branch
      %71 = sbr.rel (0) target = $region45
    $region44: #{neural_plasticity_memory.1} parent=1 // pred_region
      %72 = dma.done [#allocation5], 1024
    $region45: #{neural_plasticity_memory.1} parent=1 // pred_fallthru
      _
    %v74 = vld [vmem:[%s0] sm:$0xff]
    %v75 = vld [vmem:[%s1] sm:$0xff]
    %v76 = vpack.c.bf16 %v74, %v74
    %v77 = vpack.c.bf16 %v75, %v75
    %v78 = vld [vmem:[#allocation2] sm:$0xff]
    %v79 = vld [vmem:[#allocation2 + $0x8] sm:$0xff]
    %v80 = vld [vmem:[#allocation2 + $0x10] sm:$0xf]
    %v81 = vld [vmem:[#allocation2 + $0x14] sm:$0xff]
    %v82 = vld [vmem:[#allocation2 + $0x1c] sm:$0xff]
    %v83 = vld [vmem:[#allocation2 + $0x24] sm:$0xf]
    %v84 = vld [vmem:[#allocation2 + $0x28] sm:$0xff]
    %v85 = vld [vmem:[#allocation2 + $0x30] sm:$0xff]
    %v86 = vld [vmem:[#allocation2 + $0x38] sm:$0xf]
    %v87 = vld [vmem:[#allocation2 + $0x3c] sm:$0xff]
    %v88 = vld [vmem:[#allocation2 + $0x44] sm:$0xff]
    %v89 = vld [vmem:[#allocation2 + $0x4c] sm:$0xf]
    %v90 = vld [vmem:[#allocation2 + $0x50] sm:$0xff]
    %v91 = vld [vmem:[#allocation2 + $0x58] sm:$0xff]
    %v92 = vld [vmem:[#allocation2 + $0x60] sm:$0xf]
    %v93 = vld [vmem:[#allocation2 + $0x64] sm:$0xff]
    %v94 = vld [vmem:[#allocation2 + $0x6c] sm:$0xff]
    %v95 = vld [vmem:[#allocation2 + $0x74] sm:$0xf]
    %v96 = vld [vmem:[#allocation2 + $0x78] sm:$0xff]
    %v97 = vld [vmem:[#allocation2 + $0x80] sm:$0xff]
    %v98 = vld [vmem:[#allocation2 + $0x88] sm:$0xf]
    %v99 = vld [vmem:[#allocation2 + $0x8c] sm:$0xff]
    %v100 = vld [vmem:[#allocation2 + $0x94] sm:$0xff]
    %v101 = vld [vmem:[#allocation2 + $0x9c] sm:$0xf]
    %v102 = vld [vmem:[#allocation2 + $0xa0] sm:$0xff]
    %v103 = vld [vmem:[#allocation2 + $0xa8] sm:$0xff]
    %v104 = vld [vmem:[#allocation2 + $0xb0] sm:$0xf]
    %v105 = vld [vmem:[#allocation2 + $0xb4] sm:$0xff]
    %v106 = vld [vmem:[#allocation2 + $0xbc] sm:$0xff]
    %v107 = vld [vmem:[#allocation2 + $0xc4] sm:$0xf]
    %v108 = vld [vmem:[#allocation2 + $0xc8] sm:$0xff]
    %v109 = vld [vmem:[#allocation2 + $0xd0] sm:$0xff]
    %v110 = vld [vmem:[#allocation2 + $0xd8] sm:$0xf]
    %v111 = vld [vmem:[#allocation2 + $0xdc] sm:$0xff]
    %v112 = vld [vmem:[#allocation2 + $0xe4] sm:$0xff]
    %v113 = vld [vmem:[#allocation2 + $0xec] sm:$0xf]
    %v114 = vld [vmem:[#allocation2 + $0xf0] sm:$0xff]
    %v115 = vld [vmem:[#allocation2 + $0xf8] sm:$0xff]
    %v116 = vld [vmem:[#allocation2 + $0x100] sm:$0xf]
    %v117 = vld [vmem:[#allocation2 + $0x104] sm:$0xff]
    %v118 = vld [vmem:[#allocation2 + $0x10c] sm:$0xff]
    %v119 = vld [vmem:[#allocation2 + $0x114] sm:$0xf]
    %v120 = vld [vmem:[#allocation2 + $0x118] sm:$0xff]
    %v121 = vld [vmem:[#allocation2 + $0x120] sm:$0xff]
    %v122 = vld [vmem:[#allocation2 + $0x128] sm:$0xf]
    %v123 = vld [vmem:[#allocation2 + $0x12c] sm:$0xff]
    %v124 = vld [vmem:[#allocation2 + $0x134] sm:$0xff]
    %v125 = vld [vmem:[#allocation2 + $0x13c] sm:$0xf]
    %v126 = vld [vmem:[%s3] sm:$0x1f]
    %v128 = vlaneseq
    %v129 = vshrl.u32 %v128, 7
    %v130 = vsub.s32 0, %v129
    %v131 = vrot.slane %v126, %v130
    %v132 = vlaneseq
    %v133 = vshrl.u32 %v132, 7
    %v134 = vsub.s32 1, %v133
    %v135 = vrot.slane %v126, %v134
    %v136 = vlaneseq
    %v137 = vshrl.u32 %v136, 7
    %v138 = vsub.s32 2, %v137
    %v139 = vrot.slane %v126, %v138
    %v140 = vlaneseq
    %v141 = vshrl.u32 %v140, 7
    %v142 = vsub.s32 3, %v141
    %v143 = vrot.slane %v126, %v142
    %v144 = vlaneseq
    %v145 = vshrl.u32 %v144, 7
    %v146 = vsub.s32 4, %v145
    %v147 = vrot.slane %v126, %v146
    %v201 = vunpack.c.l.b16 %v78
    %v202 = vunpack.c.h.b16 %v78
    %v203 = vunpack.c.l.b16 %v79
    %v204 = vunpack.c.h.b16 %v79
    %v205 = vunpack.c.l.b16 %v80
    %v206 = vunpack.c.l.b16 %v81
    %v207 = vunpack.c.h.b16 %v81
    %v208 = vunpack.c.l.b16 %v82
    %v209 = vunpack.c.h.b16 %v82
    %v210 = vunpack.c.l.b16 %v83
    %v211 = vunpack.c.l.b16 %v84
    %v212 = vunpack.c.h.b16 %v84
    %v213 = vunpack.c.l.b16 %v85
    %v214 = vunpack.c.h.b16 %v85
    %v215 = vunpack.c.l.b16 %v86
    %v216 = vunpack.c.l.b16 %v87
    %v217 = vunpack.c.h.b16 %v87
    %v218 = vunpack.c.l.b16 %v88
    %v219 = vunpack.c.h.b16 %v88
    %v220 = vunpack.c.l.b16 %v89
    %v221 = vunpack.c.l.b16 %v90
    %v222 = vunpack.c.h.b16 %v90
    %v223 = vunpack.c.l.b16 %v91
    %v224 = vunpack.c.h.b16 %v91
    %v225 = vunpack.c.l.b16 %v92
    %v226 = vunpack.c.l.b16 %v93
    %v227 = vunpack.c.h.b16 %v93
    %v228 = vunpack.c.l.b16 %v94
    %v229 = vunpack.c.h.b16 %v94
    %v230 = vunpack.c.l.b16 %v95
    %v231 = vunpack.c.l.b16 %v96
    %v232 = vunpack.c.h.b16 %v96
    %v233 = vunpack.c.l.b16 %v97
    %v234 = vunpack.c.h.b16 %v97
    %v235 = vunpack.c.l.b16 %v98
    %v236 = vunpack.c.l.b16 %v99
    %v237 = vunpack.c.h.b16 %v99
    %v238 = vunpack.c.l.b16 %v100
    %v239 = vunpack.c.h.b16 %v100
    %v240 = vunpack.c.l.b16 %v101
    %v241 = vunpack.c.l.b16 %v102
    %v242 = vunpack.c.h.b16 %v102
    %v243 = vunpack.c.l.b16 %v103
    %v244 = vunpack.c.h.b16 %v103
    %v245 = vunpack.c.l.b16 %v104
    %v246 = vunpack.c.l.b16 %v105
    %v247 = vunpack.c.h.b16 %v105
    %v248 = vunpack.c.l.b16 %v106
    %v249 = vunpack.c.h.b16 %v106
    %v250 = vunpack.c.l.b16 %v107
    %v251 = vunpack.c.l.b16 %v108
    %v252 = vunpack.c.h.b16 %v108
    %v253 = vunpack.c.l.b16 %v109
    %v254 = vunpack.c.h.b16 %v109
    %v255 = vunpack.c.l.b16 %v110
    %v256 = vunpack.c.l.b16 %v111
    %v257 = vunpack.c.h.b16 %v111
    %v258 = vunpack.c.l.b16 %v112
    %v259 = vunpack.c.h.b16 %v112
    %v260 = vunpack.c.l.b16 %v113
    %v261 = vunpack.c.l.b16 %v114
    %v262 = vunpack.c.h.b16 %v114
    %v263 = vunpack.c.l.b16 %v115
    %v264 = vunpack.c.h.b16 %v115
    %v265 = vunpack.c.l.b16 %v116
    %v266 = vunpack.c.l.b16 %v117
    %v267 = vunpack.c.h.b16 %v117
    %v268 = vunpack.c.l.b16 %v118
    %v269 = vunpack.c.h.b16 %v118
    %v270 = vunpack.c.l.b16 %v119
    %v271 = vunpack.c.l.b16 %v120
    %v272 = vunpack.c.h.b16 %v120
    %v273 = vunpack.c.l.b16 %v121
    %v274 = vunpack.c.h.b16 %v121
    %v275 = vunpack.c.l.b16 %v122
    %v276 = vunpack.c.l.b16 %v123
    %v277 = vunpack.c.h.b16 %v123
    %v278 = vunpack.c.l.b16 %v124
    %v279 = vunpack.c.h.b16 %v124
    %v280 = vunpack.c.l.b16 %v125
    %v281 = vpack.c.b16 %v206, %v201
    %v282 = vpack.c.b16 %v207, %v202
    %v283 = vpack.c.b16 %v208, %v203
    %v284 = vpack.c.b16 %v209, %v204
    %v285 = vpack.c.b16 %v210, %v205
    %v286 = vpack.c.b16 %v216, %v211
    %v287 = vpack.c.b16 %v217, %v212
    %v288 = vpack.c.b16 %v218, %v213
    %v289 = vpack.c.b16 %v219, %v214
    %v290 = vpack.c.b16 %v220, %v215
    %v291 = vpack.c.b16 %v226, %v221
    %v292 = vpack.c.b16 %v227, %v222
    %v293 = vpack.c.b16 %v228, %v223
    %v294 = vpack.c.b16 %v229, %v224
    %v295 = vpack.c.b16 %v230, %v225
    %v296 = vpack.c.b16 %v236, %v231
    %v297 = vpack.c.b16 %v237, %v232
    %v298 = vpack.c.b16 %v238, %v233
    %v299 = vpack.c.b16 %v239, %v234
    %v300 = vpack.c.b16 %v240, %v235
    %v301 = vpack.c.b16 %v246, %v241
    %v302 = vpack.c.b16 %v247, %v242
    %v303 = vpack.c.b16 %v248, %v243
    %v304 = vpack.c.b16 %v249, %v244
    %v305 = vpack.c.b16 %v250, %v245
    %v306 = vpack.c.b16 %v256, %v251
    %v307 = vpack.c.b16 %v257, %v252
    %v308 = vpack.c.b16 %v258, %v253
    %v309 = vpack.c.b16 %v259, %v254
    %v310 = vpack.c.b16 %v260, %v255
    %v311 = vpack.c.b16 %v266, %v261
    %v312 = vpack.c.b16 %v267, %v262
    %v313 = vpack.c.b16 %v268, %v263
    %v314 = vpack.c.b16 %v269, %v264
    %v315 = vpack.c.b16 %v270, %v265
    %v316 = vpack.c.b16 %v276, %v271
    %v317 = vpack.c.b16 %v277, %v272
    %v318 = vpack.c.b16 %v278, %v273
    %v319 = vpack.c.b16 %v279, %v274
    %v320 = vpack.c.b16 %v280, %v275
    %361 = vmatprep.subr.bf16.mxu0 %v317
    %362 = vmatpush1.bf16.msra.mxu0 %v316
    %363 = vmatprep.subr.bf16.mxu0 %v312
    %364 = vmatpush1.bf16.msra.mxu0 %v311
    %365 = vmatprep.subr.bf16.mxu0 %v307
    %366 = vmatpush1.bf16.msra.mxu0 %v306
    %367 = vmatprep.subr.bf16.mxu0 %v302
    %368 = vmatpush1.bf16.msra.mxu0 %v301
    %369 = vmatprep.subr.bf16.mxu0 %v297
    %370 = vmatpush1.bf16.msra.mxu0 %v296
    %371 = vmatprep.subr.bf16.mxu0 %v292
    %372 = vmatpush1.bf16.msra.mxu0 %v291
    %373 = vmatprep.subr.bf16.mxu0 %v287
    %374 = vmatpush1.bf16.msra.mxu0 %v286
    %375 = vmatprep.subr.bf16.mxu0 %v282
    %376 = vmatpush1.bf16.msra.mxu0 %v281
    %377 = vmatprep.subr.bf16.mxu0 0
    %378 = vmatpush2.bf16.msra.mxu0 0
    %379 = vmatprep.subr.bf16.mxu0 0
    %380 = vmatpush2.bf16.msra.mxu0 0
    %381 = vmatprep.subr.bf16.mxu0 0
    %382 = vmatpush2.bf16.msra.mxu0 0
    %383 = vmatprep.subr.bf16.mxu0 0
    %384 = vmatpush2.bf16.msra.mxu0 0
    %385 = vmatprep.subr.bf16.mxu0 0
    %386 = vmatpush2.bf16.msra.mxu0 0
    %387 = vmatprep.subr.bf16.mxu0 0
    %388 = vmatpush2.bf16.msra.mxu0 0
    %389 = vmatprep.subr.bf16.mxu0 0
    %390 = vmatpush2.bf16.msra.mxu0 0
    %391 = vmatprep.subr.bf16.mxu0 0
    %392 = vmatpush2.bf16.msra.mxu0 0
    %393 = vmatprep.mubr.bf16.mxu0 0
    %394 = vmatmul.mubr.bf16.gmra.mxu0 %v76
    %v395 = vpop.f32.mrf.mxu0
    %v396 = vadd.f32 %v131, %v395
    %v397 = vpop.f32.mrf.mxu0
    %v398 = vadd.f32 %v135, %v397
    %v399 = vpop.f32.mrf.mxu0
    %v400 = vpop.f32.mrf.mxu0
    %401 = vdwg.mxu0
    %402 = vmatprep.subr.bf16.mxu0 %v319
    %403 = vmatpush1.bf16.msra.mxu0 %v318
    %404 = vmatprep.subr.bf16.mxu0 %v314
    %405 = vmatpush1.bf16.msra.mxu0 %v313
    %406 = vmatprep.subr.bf16.mxu0 %v309
    %407 = vmatpush1.bf16.msra.mxu0 %v308
    %408 = vmatprep.subr.bf16.mxu0 %v304
    %409 = vmatpush1.bf16.msra.mxu0 %v303
    %410 = vmatprep.subr.bf16.mxu0 %v299
    %411 = vmatpush1.bf16.msra.mxu0 %v298
    %412 = vmatprep.subr.bf16.mxu0 %v294
    %413 = vmatpush1.bf16.msra.mxu0 %v293
    %414 = vmatprep.subr.bf16.mxu0 %v289
    %415 = vmatpush1.bf16.msra.mxu0 %v288
    %416 = vmatprep.subr.bf16.mxu0 %v284
    %417 = vmatpush1.bf16.msra.mxu0 %v283
    %418 = vmatprep.subr.bf16.mxu0 0
    %419 = vmatpush2.bf16.msra.mxu0 0
    %420 = vmatprep.subr.bf16.mxu0 0
    %421 = vmatpush2.bf16.msra.mxu0 0
    %422 = vmatprep.subr.bf16.mxu0 0
    %423 = vmatpush2.bf16.msra.mxu0 0
    %424 = vmatprep.subr.bf16.mxu0 0
    %425 = vmatpush2.bf16.msra.mxu0 0
    %426 = vmatprep.subr.bf16.mxu0 0
    %427 = vmatpush2.bf16.msra.mxu0 0
    %428 = vmatprep.subr.bf16.mxu0 0
    %429 = vmatpush2.bf16.msra.mxu0 0
    %430 = vmatprep.subr.bf16.mxu0 0
    %431 = vmatpush2.bf16.msra.mxu0 0
    %432 = vmatprep.subr.bf16.mxu0 0
    %433 = vmatpush2.bf16.msra.mxu0 0
    %434 = vmatprep.mubr.bf16.mxu0 0
    %435 = vmatmul.mubr.bf16.gmra.mxu0 %v76
    %v436 = vpop.f32.mrf.mxu0
    %v437 = vadd.f32 %v139, %v436
    %v438 = vpop.f32.mrf.mxu0
    %v439 = vadd.f32 %v143, %v438
    %v440 = vpop.f32.mrf.mxu0
    %v441 = vpop.f32.mrf.mxu0
    %442 = vdwg.mxu0
    %443 = vmatprep.subr.bf16.mxu0 0
    %444 = vmatpush1.bf16.msra.mxu0 %v320
    %445 = vmatprep.subr.bf16.mxu0 0
    %446 = vmatpush1.bf16.msra.mxu0 %v315
    %447 = vmatprep.subr.bf16.mxu0 0
    %448 = vmatpush1.bf16.msra.mxu0 %v310
    %449 = vmatprep.subr.bf16.mxu0 0
    %450 = vmatpush1.bf16.msra.mxu0 %v305
    %451 = vmatprep.subr.bf16.mxu0 0
    %452 = vmatpush1.bf16.msra.mxu0 %v300
    %453 = vmatprep.subr.bf16.mxu0 0
    %454 = vmatpush1.bf16.msra.mxu0 %v295
    %455 = vmatprep.subr.bf16.mxu0 0
    %456 = vmatpush1.bf16.msra.mxu0 %v290
    %457 = vmatprep.subr.bf16.mxu0 0
    %458 = vmatpush1.bf16.msra.mxu0 %v285
    %459 = vmatprep.subr.bf16.mxu0 0
    %460 = vmatpush2.bf16.msra.mxu0 0
    %461 = vmatprep.subr.bf16.mxu0 0
    %462 = vmatpush2.bf16.msra.mxu0 0
    %463 = vmatprep.subr.bf16.mxu0 0
    %464 = vmatpush2.bf16.msra.mxu0 0
    %465 = vmatprep.subr.bf16.mxu0 0
    %466 = vmatpush2.bf16.msra.mxu0 0
    %467 = vmatprep.subr.bf16.mxu0 0
    %468 = vmatpush2.bf16.msra.mxu0 0
    %469 = vmatprep.subr.bf16.mxu0 0
    %470 = vmatpush2.bf16.msra.mxu0 0
    %471 = vmatprep.subr.bf16.mxu0 0
    %472 = vmatpush2.bf16.msra.mxu0 0
    %473 = vmatprep.subr.bf16.mxu0 0
    %474 = vmatpush2.bf16.msra.mxu0 0
    %475 = vmatprep.mubr.bf16.mxu0 0
    %476 = vmatmul.mubr.bf16.gmra.mxu0 %v76
    %v477 = vpop.f32.mrf.mxu0
    %v478 = vadd.f32 %v147, %v477
    %v479 = vpop.f32.mrf.mxu0
    %v480 = vpop.f32.mrf.mxu0
    %v481 = vpop.f32.mrf.mxu0
    %482 = vdwg.mxu0
    %v483 = vld [vmem:[#allocation4] sm:$0xff]
    %v484 = vld [vmem:[#allocation4 + $0x8] sm:$0xff]
    %v485 = vld [vmem:[#allocation4 + $0x10] sm:$0xff]
    %v486 = vld [vmem:[#allocation4 + $0x18] sm:$0xff]
    %v487 = vld [vmem:[#allocation4 + $0x20] sm:$0xff]
    %v488 = vld [vmem:[#allocation4 + $0x28] sm:$0xff]
    %v489 = vld [vmem:[#allocation4 + $0x30] sm:$0xff]
    %v490 = vld [vmem:[#allocation4 + $0x38] sm:$0xff]
    %v491 = vld [vmem:[#allocation4 + $0x40] sm:$0xff]
    %v492 = vld [vmem:[#allocation4 + $0x48] sm:$0xff]
    %v493 = vld [vmem:[#allocation4 + $0x50] sm:$0xff]
    %v494 = vld [vmem:[#allocation4 + $0x58] sm:$0xff]
    %v495 = vld [vmem:[#allocation4 + $0x60] sm:$0xff]
    %v496 = vld [vmem:[#allocation4 + $0x68] sm:$0xff]
    %v497 = vld [vmem:[#allocation4 + $0x70] sm:$0xff]
    %v498 = vld [vmem:[#allocation4 + $0x78] sm:$0xff]
    %v499 = vld [vmem:[#allocation4 + $0x80] sm:$0xff]
    %v500 = vld [vmem:[#allocation4 + $0x88] sm:$0xff]
    %v501 = vld [vmem:[#allocation4 + $0x90] sm:$0xff]
    %v502 = vld [vmem:[#allocation4 + $0x98] sm:$0xff]
    %v503 = vld [vmem:[#allocation4 + $0xa0] sm:$0xff]
    %v504 = vld [vmem:[#allocation4 + $0xa8] sm:$0xff]
    %v505 = vld [vmem:[#allocation4 + $0xb0] sm:$0xff]
    %v506 = vld [vmem:[#allocation4 + $0xb8] sm:$0xff]
    %v507 = vld [vmem:[#allocation4 + $0xc0] sm:$0xff]
    %v508 = vld [vmem:[#allocation4 + $0xc8] sm:$0xff]
    %v509 = vld [vmem:[#allocation4 + $0xd0] sm:$0xff]
    %v510 = vld [vmem:[#allocation4 + $0xd8] sm:$0xff]
    %v511 = vld [vmem:[#allocation4 + $0xe0] sm:$0xff]
    %v512 = vld [vmem:[#allocation4 + $0xe8] sm:$0xff]
    %v513 = vld [vmem:[#allocation4 + $0xf0] sm:$0xff]
    %v514 = vld [vmem:[#allocation4 + $0xf8] sm:$0xff]
    %v515 = vld [vmem:[%s5] sm:$0xf]
    %v517 = vlaneseq
    %v518 = vshrl.u32 %v517, 7
    %v519 = vsub.s32 0, %v518
    %v520 = vrot.slane %v515, %v519
    %v521 = vlaneseq
    %v522 = vshrl.u32 %v521, 7
    %v523 = vsub.s32 1, %v522
    %v524 = vrot.slane %v515, %v523
    %v525 = vlaneseq
    %v526 = vshrl.u32 %v525, 7
    %v527 = vsub.s32 2, %v526
    %v528 = vrot.slane %v515, %v527
    %v529 = vlaneseq
    %v530 = vshrl.u32 %v529, 7
    %v531 = vsub.s32 3, %v530
    %v532 = vrot.slane %v515, %v531
    %v569 = vunpack.c.l.b16 %v483
    %v570 = vunpack.c.h.b16 %v483
    %v571 = vunpack.c.l.b16 %v484
    %v572 = vunpack.c.h.b16 %v484
    %v573 = vunpack.c.l.b16 %v485
    %v574 = vunpack.c.h.b16 %v485
    %v575 = vunpack.c.l.b16 %v486
    %v576 = vunpack.c.h.b16 %v486
    %v577 = vunpack.c.l.b16 %v487
    %v578 = vunpack.c.h.b16 %v487
    %v579 = vunpack.c.l.b16 %v488
    %v580 = vunpack.c.h.b16 %v488
    %v581 = vunpack.c.l.b16 %v489
    %v582 = vunpack.c.h.b16 %v489
    %v583 = vunpack.c.l.b16 %v490
    %v584 = vunpack.c.h.b16 %v490
    %v585 = vunpack.c.l.b16 %v491
    %v586 = vunpack.c.h.b16 %v491
    %v587 = vunpack.c.l.b16 %v492
    %v588 = vunpack.c.h.b16 %v492
    %v589 = vunpack.c.l.b16 %v493
    %v590 = vunpack.c.h.b16 %v493
    %v591 = vunpack.c.l.b16 %v494
    %v592 = vunpack.c.h.b16 %v494
    %v593 = vunpack.c.l.b16 %v495
    %v594 = vunpack.c.h.b16 %v495
    %v595 = vunpack.c.l.b16 %v496
    %v596 = vunpack.c.h.b16 %v496
    %v597 = vunpack.c.l.b16 %v497
    %v598 = vunpack.c.h.b16 %v497
    %v599 = vunpack.c.l.b16 %v498
    %v600 = vunpack.c.h.b16 %v498
    %v601 = vunpack.c.l.b16 %v499
    %v602 = vunpack.c.h.b16 %v499
    %v603 = vunpack.c.l.b16 %v500
    %v604 = vunpack.c.h.b16 %v500
    %v605 = vunpack.c.l.b16 %v501
    %v606 = vunpack.c.h.b16 %v501
    %v607 = vunpack.c.l.b16 %v502
    %v608 = vunpack.c.h.b16 %v502
    %v609 = vunpack.c.l.b16 %v503
    %v610 = vunpack.c.h.b16 %v503
    %v611 = vunpack.c.l.b16 %v504
    %v612 = vunpack.c.h.b16 %v504
    %v613 = vunpack.c.l.b16 %v505
    %v614 = vunpack.c.h.b16 %v505
    %v615 = vunpack.c.l.b16 %v506
    %v616 = vunpack.c.h.b16 %v506
    %v617 = vunpack.c.l.b16 %v507
    %v618 = vunpack.c.h.b16 %v507
    %v619 = vunpack.c.l.b16 %v508
    %v620 = vunpack.c.h.b16 %v508
    %v621 = vunpack.c.l.b16 %v509
    %v622 = vunpack.c.h.b16 %v509
    %v623 = vunpack.c.l.b16 %v510
    %v624 = vunpack.c.h.b16 %v510
    %v625 = vunpack.c.l.b16 %v511
    %v626 = vunpack.c.h.b16 %v511
    %v627 = vunpack.c.l.b16 %v512
    %v628 = vunpack.c.h.b16 %v512
    %v629 = vunpack.c.l.b16 %v513
    %v630 = vunpack.c.h.b16 %v513
    %v631 = vunpack.c.l.b16 %v514
    %v632 = vunpack.c.h.b16 %v514
    %v633 = vpack.c.b16 %v573, %v569
    %v634 = vpack.c.b16 %v574, %v570
    %v635 = vpack.c.b16 %v575, %v571
    %v636 = vpack.c.b16 %v576, %v572
    %v637 = vpack.c.b16 %v581, %v577
    %v638 = vpack.c.b16 %v582, %v578
    %v639 = vpack.c.b16 %v583, %v579
    %v640 = vpack.c.b16 %v584, %v580
    %v641 = vpack.c.b16 %v589, %v585
    %v642 = vpack.c.b16 %v590, %v586
    %v643 = vpack.c.b16 %v591, %v587
    %v644 = vpack.c.b16 %v592, %v588
    %v645 = vpack.c.b16 %v597, %v593
    %v646 = vpack.c.b16 %v598, %v594
    %v647 = vpack.c.b16 %v599, %v595
    %v648 = vpack.c.b16 %v600, %v596
    %v649 = vpack.c.b16 %v605, %v601
    %v650 = vpack.c.b16 %v606, %v602
    %v651 = vpack.c.b16 %v607, %v603
    %v652 = vpack.c.b16 %v608, %v604
    %v653 = vpack.c.b16 %v613, %v609
    %v654 = vpack.c.b16 %v614, %v610
    %v655 = vpack.c.b16 %v615, %v611
    %v656 = vpack.c.b16 %v616, %v612
    %v657 = vpack.c.b16 %v621, %v617
    %v658 = vpack.c.b16 %v622, %v618
    %v659 = vpack.c.b16 %v623, %v619
    %v660 = vpack.c.b16 %v624, %v620
    %v661 = vpack.c.b16 %v629, %v625
    %v662 = vpack.c.b16 %v630, %v626
    %v663 = vpack.c.b16 %v631, %v627
    %v664 = vpack.c.b16 %v632, %v628
    %697 = vmatprep.subr.bf16.mxu0 %v662
    %698 = vmatpush1.bf16.msra.mxu0 %v661
    %699 = vmatprep.subr.bf16.mxu0 %v658
    %700 = vmatpush1.bf16.msra.mxu0 %v657
    %701 = vmatprep.subr.bf16.mxu0 %v654
    %702 = vmatpush1.bf16.msra.mxu0 %v653
    %703 = vmatprep.subr.bf16.mxu0 %v650
    %704 = vmatpush1.bf16.msra.mxu0 %v649
    %705 = vmatprep.subr.bf16.mxu0 %v646
    %706 = vmatpush1.bf16.msra.mxu0 %v645
    %707 = vmatprep.subr.bf16.mxu0 %v642
    %708 = vmatpush1.bf16.msra.mxu0 %v641
    %709 = vmatprep.subr.bf16.mxu0 %v638
    %710 = vmatpush1.bf16.msra.mxu0 %v637
    %711 = vmatprep.subr.bf16.mxu0 %v634
    %712 = vmatpush1.bf16.msra.mxu0 %v633
    %713 = vmatprep.subr.bf16.mxu0 0
    %714 = vmatpush2.bf16.msra.mxu0 0
    %715 = vmatprep.subr.bf16.mxu0 0
    %716 = vmatpush2.bf16.msra.mxu0 0
    %717 = vmatprep.subr.bf16.mxu0 0
    %718 = vmatpush2.bf16.msra.mxu0 0
    %719 = vmatprep.subr.bf16.mxu0 0
    %720 = vmatpush2.bf16.msra.mxu0 0
    %721 = vmatprep.subr.bf16.mxu0 0
    %722 = vmatpush2.bf16.msra.mxu0 0
    %723 = vmatprep.subr.bf16.mxu0 0
    %724 = vmatpush2.bf16.msra.mxu0 0
    %725 = vmatprep.subr.bf16.mxu0 0
    %726 = vmatpush2.bf16.msra.mxu0 0
    %727 = vmatprep.subr.bf16.mxu0 0
    %728 = vmatpush2.bf16.msra.mxu0 0
    %729 = vmatprep.mubr.bf16.mxu0 0
    %730 = vmatmul.mubr.bf16.gmra.mxu0 %v77
    %v731 = vpop.f32.mrf.mxu0
    %v732 = vadd.f32 %v520, %v731
    %v733 = vpop.f32.mrf.mxu0
    %v734 = vadd.f32 %v524, %v733
    %v735 = vpop.f32.mrf.mxu0
    %v736 = vpop.f32.mrf.mxu0
    %737 = vdwg.mxu0
    %738 = vmatprep.subr.bf16.mxu0 %v664
    %739 = vmatpush1.bf16.msra.mxu0 %v663
    %740 = vmatprep.subr.bf16.mxu0 %v660
    %741 = vmatpush1.bf16.msra.mxu0 %v659
    %742 = vmatprep.subr.bf16.mxu0 %v656
    %743 = vmatpush1.bf16.msra.mxu0 %v655
    %744 = vmatprep.subr.bf16.mxu0 %v652
    %745 = vmatpush1.bf16.msra.mxu0 %v651
    %746 = vmatprep.subr.bf16.mxu0 %v648
    %747 = vmatpush1.bf16.msra.mxu0 %v647
    %748 = vmatprep.subr.bf16.mxu0 %v644
    %749 = vmatpush1.bf16.msra.mxu0 %v643
    %750 = vmatprep.subr.bf16.mxu0 %v640
    %751 = vmatpush1.bf16.msra.mxu0 %v639
    %752 = vmatprep.subr.bf16.mxu0 %v636
    %753 = vmatpush1.bf16.msra.mxu0 %v635
    %754 = vmatprep.subr.bf16.mxu0 0
    %755 = vmatpush2.bf16.msra.mxu0 0
    %756 = vmatprep.subr.bf16.mxu0 0
    %757 = vmatpush2.bf16.msra.mxu0 0
    %758 = vmatprep.subr.bf16.mxu0 0
    %759 = vmatpush2.bf16.msra.mxu0 0
    %760 = vmatprep.subr.bf16.mxu0 0
    %761 = vmatpush2.bf16.msra.mxu0 0
    %762 = vmatprep.subr.bf16.mxu0 0
    %763 = vmatpush2.bf16.msra.mxu0 0
    %764 = vmatprep.subr.bf16.mxu0 0
    %765 = vmatpush2.bf16.msra.mxu0 0
    %766 = vmatprep.subr.bf16.mxu0 0
    %767 = vmatpush2.bf16.msra.mxu0 0
    %768 = vmatprep.subr.bf16.mxu0 0
    %769 = vmatpush2.bf16.msra.mxu0 0
    %770 = vmatprep.mubr.bf16.mxu0 0
    %771 = vmatmul.mubr.bf16.gmra.mxu0 %v77
    %v772 = vpop.f32.mrf.mxu0
    %v773 = vadd.f32 %v528, %v772
    %v774 = vpop.f32.mrf.mxu0
    %v775 = vadd.f32 %v532, %v774
    %v776 = vpop.f32.mrf.mxu0
    %v777 = vpop.f32.mrf.mxu0
    %778 = vdwg.mxu0
    %v779 = vadd.f32 %v396, %v732
    %v780 = vxor.u32 %v779, 2147483648
    %v781 = vmul.f32 %v780, 1.442695
    %v782 = vpow.pop %v781
    %v783 = vadd.f32 %v782, 1.0
    %v784 = vrcp.pop %v783
    %v785 = vmul.f32 1.0, %v784
    %v786 = vadd.f32 %v398, %v734
    %v787 = vxor.u32 %v786, 2147483648
    %v788 = vmul.f32 %v787, 1.442695
    %v789 = vpow.pop %v788
    %v790 = vadd.f32 %v789, 1.0
    %v791 = vrcp.pop %v790
    %v792 = vmul.f32 1.0, %v791
    %v793 = vmul.f32 %v785, %v773
    %v794 = vadd.f32 %v437, %v793
    %v795 = vtanh.pop %v794
    %v796 = vsub.f32 1.0, %v792
    %v797 = vmul.f32 %v796, %v795
    %v798 = vmul.f32 %v792, %v75
    %v799 = vadd.f32 %v797, %v798
    %v800 = vadd.f32 %v439, %v775
    %v801 = vxor.u32 %v800, 2147483648
    %v802 = vmul.f32 %v801, 1.442695
    %v803 = vpow.pop %v802
    %v804 = vadd.f32 %v803, 1.0
    %v805 = vrcp.pop %v804
    %v806 = vmul.f32 1.0, %v805
    %v807 = vmax.f32 %v478, 0.0
    %v808 = vpack.c.bf16 %v807, %v807
    %v809 = vld [vmem:[#allocation6] sm:$0xf]
    %v810 = vld [vmem:[#allocation6 + $0x4] sm:$0xf]
    %v811 = vld [vmem:[#allocation6 + $0x8] sm:$0xf]
    %v812 = vld [vmem:[#allocation6 + $0xc] sm:$0xf]
    %v813 = vld [vmem:[#allocation6 + $0x10] sm:$0xf]
    %v814 = vld [vmem:[#allocation6 + $0x14] sm:$0xf]
    %v815 = vld [vmem:[#allocation6 + $0x18] sm:$0xf]
    %v816 = vld [vmem:[#allocation6 + $0x1c] sm:$0xf]
    %v817 = vld [vmem:[#allocation6 + $0x20] sm:$0xf]
    %v818 = vld [vmem:[#allocation6 + $0x24] sm:$0xf]
    %v819 = vld [vmem:[#allocation6 + $0x28] sm:$0xf]
    %v820 = vld [vmem:[#allocation6 + $0x2c] sm:$0xf]
    %v821 = vld [vmem:[#allocation6 + $0x30] sm:$0xf]
    %v822 = vld [vmem:[#allocation6 + $0x34] sm:$0xf]
    %v823 = vld [vmem:[#allocation6 + $0x38] sm:$0xf]
    %v824 = vld [vmem:[#allocation6 + $0x3c] sm:$0xf]
    %v825 = vld [vmem:[%s7] sm:$0x1]
    %v827 = vlaneseq
    %v828 = vshrl.u32 %v827, 7
    %v829 = vsub.s32 0, %v828
    %v830 = vrot.slane %v825, %v829
    %v848 = vunpack.c.l.b16 %v809
    %v849 = vunpack.c.l.b16 %v810
    %v850 = vunpack.c.l.b16 %v811
    %v851 = vunpack.c.l.b16 %v812
    %v852 = vunpack.c.l.b16 %v813
    %v853 = vunpack.c.l.b16 %v814
    %v854 = vunpack.c.l.b16 %v815
    %v855 = vunpack.c.l.b16 %v816
    %v856 = vunpack.c.l.b16 %v817
    %v857 = vunpack.c.l.b16 %v818
    %v858 = vunpack.c.l.b16 %v819
    %v859 = vunpack.c.l.b16 %v820
    %v860 = vunpack.c.l.b16 %v821
    %v861 = vunpack.c.l.b16 %v822
    %v862 = vunpack.c.l.b16 %v823
    %v863 = vunpack.c.l.b16 %v824
    %v864 = vpack.c.b16 %v849, %v848
    %v865 = vpack.c.b16 %v851, %v850
    %v866 = vpack.c.b16 %v853, %v852
    %v867 = vpack.c.b16 %v855, %v854
    %v868 = vpack.c.b16 %v857, %v856
    %v869 = vpack.c.b16 %v859, %v858
    %v870 = vpack.c.b16 %v861, %v860
    %v871 = vpack.c.b16 %v863, %v862
    %880 = vmatprep.subr.bf16.mxu0 0
    %881 = vmatpush1.bf16.msra.mxu0 %v871
    %882 = vmatprep.subr.bf16.mxu0 0
    %883 = vmatpush1.bf16.msra.mxu0 %v870
    %884 = vmatprep.subr.bf16.mxu0 0
    %885 = vmatpush1.bf16.msra.mxu0 %v869
    %886 = vmatprep.subr.bf16.mxu0 0
    %887 = vmatpush1.bf16.msra.mxu0 %v868
    %888 = vmatprep.subr.bf16.mxu0 0
    %889 = vmatpush1.bf16.msra.mxu0 %v867
    %890 = vmatprep.subr.bf16.mxu0 0
    %891 = vmatpush1.bf16.msra.mxu0 %v866
    %892 = vmatprep.subr.bf16.mxu0 0
    %893 = vmatpush1.bf16.msra.mxu0 %v865
    %894 = vmatprep.subr.bf16.mxu0 0
    %895 = vmatpush1.bf16.msra.mxu0 %v864
    %896 = vmatprep.subr.bf16.mxu0 0
    %897 = vmatpush2.bf16.msra.mxu0 0
    %898 = vmatprep.subr.bf16.mxu0 0
    %899 = vmatpush2.bf16.msra.mxu0 0
    %900 = vmatprep.subr.bf16.mxu0 0
    %901 = vmatpush2.bf16.msra.mxu0 0
    %902 = vmatprep.subr.bf16.mxu0 0
    %903 = vmatpush2.bf16.msra.mxu0 0
    %904 = vmatprep.subr.bf16.mxu0 0
    %905 = vmatpush2.bf16.msra.mxu0 0
    %906 = vmatprep.subr.bf16.mxu0 0
    %907 = vmatpush2.bf16.msra.mxu0 0
    %908 = vmatprep.subr.bf16.mxu0 0
    %909 = vmatpush2.bf16.msra.mxu0 0
    %910 = vmatprep.subr.bf16.mxu0 0
    %911 = vmatpush2.bf16.msra.mxu0 0
    %912 = vmatprep.mubr.bf16.mxu0 0
    %913 = vmatmul.mubr.bf16.gmra.mxu0 %v808
    %v914 = vpop.f32.mrf.mxu0
    %v915 = vadd.f32 %v830, %v914
    %v916 = vpop.f32.mrf.mxu0
    %v917 = vpop.f32.mrf.mxu0
    %v918 = vpop.f32.mrf.mxu0
    %919 = vdwg.mxu0
    %v920 = vxor.u32 %v915, 2147483648
    %v921 = vmul.f32 %v920, 1.442695
    %v922 = vpow.pop %v921
    %v923 = vadd.f32 %v922, 1.0
    %v924 = vrcp.pop %v923
    %v925 = vmul.f32 1.0, %v924
    %v926 = vmul.f32 %v806, %v925
    %927 = vst [vmem:[%s8] sm:$0xff] %v799
    %928 = vst [vmem:[%s9] sm:$0xff] %v926
    %v929 = vsub.f32 1.0, %v926
    %v930 = vmul.f32 %v929, %v75
    %v931 = vmul.f32 %v926, %v799
    %v932 = vadd.f32 %v930, %v931
    %933 = vst [vmem:[%s10] sm:$0xff] %v932
    // Predicated region
    $region46: #{neural_plasticity_memory.1} parent=1 // pred_check
      _
    $region47: #{neural_plasticity_memory.1} parent=1 // pred_check_branch
      %935 = sbr.rel (0) target = $region49
    $region48: #{neural_plasticity_memory.1} parent=1 // pred_region
      _
    $region49: #{neural_plasticity_memory.1} parent=1 // pred_fallthru
      _
    // Predicated region
    $region50: #{neural_plasticity_memory.1} parent=1 // pred_check
      _
    $region51: #{neural_plasticity_memory.1} parent=1 // pred_check_branch
      %937 = sbr.rel (0) target = $region53
    $region52: #{neural_plasticity_memory.1} parent=1 // pred_region
      _
    $region53: #{neural_plasticity_memory.1} parent=1 // pred_fallthru
      _
    // Predicated region
    $region54: #{neural_plasticity_memory.1} parent=1 // pred_check
      _
    $region55: #{neural_plasticity_memory.1} parent=1 // pred_check_branch
      %939 = sbr.rel (0) target = $region57
    $region56: #{neural_plasticity_memory.1} parent=1 // pred_region
      _
    $region57: #{neural_plasticity_memory.1} parent=1 // pred_fallthru
      _
    // Predicated region
    $region58: #{neural_plasticity_memory.1} parent=1 // pred_check
      _
    $region59: #{neural_plasticity_memory.1} parent=1 // pred_check_branch
      %941 = sbr.rel (0) target = $region61
    $region60: #{neural_plasticity_memory.1} parent=1 // pred_region
      _
    $region61: #{neural_plasticity_memory.1} parent=1 // pred_fallthru
      _
    // Predicated region
    $region62: #{neural_plasticity_memory.1} parent=1 // pred_check
      _
    $region63: #{neural_plasticity_memory.1} parent=1 // pred_check_branch
      %943 = sbr.rel (0) target = $region65
    $region64: #{neural_plasticity_memory.1} parent=1 // pred_region
      _
    $region65: #{neural_plasticity_memory.1} parent=1 // pred_fallthru
      _
    // Predicated region
    $region66: #{neural_plasticity_memory.1} parent=1 // pred_check
      _
    $region67: #{neural_plasticity_memory.1} parent=1 // pred_check_branch
      %945 = sbr.rel (0) target = $region69
    $region68: #{neural_plasticity_memory.1} parent=1 // pred_region
      _
    $region69: #{neural_plasticity_memory.1} parent=1 // pred_fallthru
      _
    %946 = vsyncpa [#allocation3], 1
    %947 = vsyncpa [#allocation5], 1

</llo_original>
